<compile_context>
chip_gen: v5e
topology: v5e:2x2
jax: 0.10.0
libtpu: 0.0.40
codegen_flags: <defaults>
</compile_context>

<pallas_src>
import jax
import jax.numpy as jnp
from jax import lax
from jax.experimental import pallas as pl
from jax.experimental.pallas import tpu as pltpu


def _sigmoid(x):
    # sigmoid(x) == 0.5 * tanh(x/2) + 0.5 ; tanh lowers to the EUP slot.
    return 0.5 * jnp.tanh(0.5 * x) + 0.5


def decoder_kernel(x_ref,
                   w1_ref, b1_ref,
                   w2_ref, b2_ref,
                   w3_ref, b3_ref,
                   w4_ref, b4_ref,
                   o_ref):
    x = x_ref[...]                                           # (TB, k) batch on sublanes
    # Layer 1: fuse the transpose into the matmul by contracting k on both
    # operands (NT form): (64, k) . (TB, k)^T -> (64, TB).  Batch ends up on
    # the 128-lane axis; every later activation is a fully dense vreg tile.
    h = lax.dot_general(w1_ref[...], x,
                        dimension_numbers=(((1,), (1,)), ((), ())),
                        preferred_element_type=jnp.float32)
    h = _sigmoid(h + b1_ref[...])                            # (64, TB)
    h = jnp.dot(w2_ref[...], h, preferred_element_type=jnp.float32)
    h = _sigmoid(h + b2_ref[...])                            # (32, TB)
    h = jnp.dot(w3_ref[...], h, preferred_element_type=jnp.float32)
    h = _sigmoid(h + b3_ref[...])                            # (16, TB)
    # Final layer (out_features == 1): VPU multiply + sublane (XLU) reduce
    # instead of a 1-row MXU matmul.
    h = jnp.sum(h * w4_ref[...], axis=0, keepdims=True)      # (1, TB)
    h = _sigmoid(h + b4_ref[...])
    o_ref[...] = h.astype(o_ref.dtype)


def _round_up(n, m):
    return ((n + m - 1) // m) * m


def _const_map(i):
    # Weights/biases: same (full-array) block for every batch tile.
    return (0, 0)


def decoder_forward(x, params, *, tile_b=4096):
    """x: (B, k) float32.
    params: list of 4 (W, b) pairs in PyTorch-Linear orientation:
            W (in_features, out_features), b (1, out_features)."""
    B, k = x.shape

    if B <= tile_b:
        # Single full-array block: legal for any B (block dims == array dims),
        # no padding, no overhang.
        tb = B
    else:
        # Multi-tile pipelined path.  tb is a multiple of 128 so x blocks are
        # sublane-aligned and output blocks are lane-dense; the last block may
        # overhang the batch and Pallas masks its reads/writes.
        tb = _round_up(min(tile_b, B), 128)
    grid = (pl.cdiv(B, tb),)

    (w1, b1), (w2, b2), (w3, b3), (w4, b4) = params
    args = [
        x,
        w1.T, b1.reshape(-1, 1),    # (64, k),  (64, 1)
        w2.T, b2.reshape(-1, 1),    # (32, 64), (32, 1)
        w3.T, b3.reshape(-1, 1),    # (16, 32), (16, 1)
        w4,   b4.reshape(-1, 1),    # (16, 1) column (VPU path), (1, 1)
    ]

    in_specs = [pl.BlockSpec((tb, k), lambda i: (i, 0))]
    for a in args[1:]:
        in_specs.append(pl.BlockSpec(a.shape, _const_map))
    out_spec = pl.BlockSpec((1, tb), lambda i: (0, i))

    out = pl.pallas_call(
        decoder_kernel,
        out_shape=jax.ShapeDtypeStruct((1, B), jnp.float32),
        grid_spec=pltpu.PrefetchScalarGridSpec(
            num_scalar_prefetch=0,
            grid=grid,
            in_specs=in_specs,
            out_specs=out_spec,
        ),
        compiler_params=pltpu.CompilerParams(
            dimension_semantics=("parallel",),
        ),
    )(*args)

    # Back to PyTorch (B, 1) convention (tiny metadata-level reshape).
    return out.reshape(B, 1)


def init_decoder_params(key, k, hidden=(64, 32, 16, 1)):
    """Deterministic synthetic init (uniform, PyTorch-Linear-like bounds)."""
    params = []
    sizes = [k] + list(hidden)
    for i in range(len(hidden)):
        fan_in, fan_out = sizes[i], sizes[i + 1]
        key, kw, kb = jax.random.split(key, 3)
        bound = 1.0 / jnp.sqrt(jnp.float32(fan_in))
        w = jax.random.uniform(kw, (fan_in, fan_out), jnp.float32, -bound, bound)
        b = jax.random.uniform(kb, (1, fan_out), jnp.float32, -bound, bound)
        params.append((w, b))
    return params


def decoder_ref(x, params):
    """Pure-JAX reference (PyTorch semantics: y = sigmoid(x @ W + b))."""
    h = x
    for (w, b) in params:
        h = jax.nn.sigmoid(h @ w + b)
    return h


if __name__ == "__main__":
    key = jax.random.PRNGKey(0)
    k = 32      # decoder input size
    B = 8       # small batch -> single full-array block path

    key, kx = jax.random.split(key)
    x = jax.random.normal(kx, (B, k), jnp.float32)
    params = init_decoder_params(key, k)

    out = jax.block_until_ready(decoder_forward(x, params))
    ref = decoder_ref(x, params)
    assert out.shape == (B, 1), out.shape
    assert jnp.allclose(out, ref, atol=2e-5, rtol=2e-5), (out, ref)

    # Multi-tile pipelined path (grid > 1) with a ragged batch: last block
    # overhangs and is masked by Pallas (no wrapper-side padding).
    B2 = 300
    key, kx2 = jax.random.split(key)
    x2 = jax.random.normal(kx2, (B2, k), jnp.float32)
    out2 = jax.block_until_ready(decoder_forward(x2, params, tile_b=128))
    ref2 = decoder_ref(x2, params)
    assert out2.shape == (B2, 1), out2.shape
    assert jnp.allclose(out2, ref2, atol=2e-5, rtol=2e-5)

    print("KERNEL_OK")
</pallas_src>

<mosaic_0001>
module attributes {stable_mosaic.version = 11 : i64} {
  func.func @decoder_kernel(%arg0: i32, %arg1: memref<8x32xf32, #tpu.memory_space<vmem>>, %arg2: memref<64x32xf32, #tpu.memory_space<vmem>>, %arg3: memref<64x1xf32, #tpu.memory_space<vmem>>, %arg4: memref<32x64xf32, #tpu.memory_space<vmem>>, %arg5: memref<32x1xf32, #tpu.memory_space<vmem>>, %arg6: memref<16x32xf32, #tpu.memory_space<vmem>>, %arg7: memref<16x1xf32, #tpu.memory_space<vmem>>, %arg8: memref<16x1xf32, #tpu.memory_space<vmem>>, %arg9: memref<1x1xf32, #tpu.memory_space<vmem>>, %arg10: memref<1x8xf32, #tpu.memory_space<vmem>>) attributes {dimension_semantics = [#tpu.dimension_semantics<parallel>], iteration_bounds = array<i64: 1>, scalar_prefetch = 0 : i64, scratch_operands = 0 : i64, tpu.core_type = #tpu.core_type<tc>, window_params = [{transform_indices = @transform_0, window_bounds = array<i64: 8, 32>}, {pipeline_mode = #tpu.pipeline_mode<synchronous>, transform_indices = @transform_1, window_bounds = array<i64: 64, 32>}, {pipeline_mode = #tpu.pipeline_mode<synchronous>, transform_indices = @transform_2, window_bounds = array<i64: 64, 1>}, {pipeline_mode = #tpu.pipeline_mode<synchronous>, transform_indices = @transform_3, window_bounds = array<i64: 32, 64>}, {pipeline_mode = #tpu.pipeline_mode<synchronous>, transform_indices = @transform_4, window_bounds = array<i64: 32, 1>}, {pipeline_mode = #tpu.pipeline_mode<synchronous>, transform_indices = @transform_5, window_bounds = array<i64: 16, 32>}, {pipeline_mode = #tpu.pipeline_mode<synchronous>, transform_indices = @transform_6, window_bounds = array<i64: 16, 1>}, {pipeline_mode = #tpu.pipeline_mode<synchronous>, transform_indices = @transform_7, window_bounds = array<i64: 16, 1>}, {pipeline_mode = #tpu.pipeline_mode<synchronous>, transform_indices = @transform_8, window_bounds = array<i64: 1, 1>}, {transform_indices = @transform_9, window_bounds = array<i64: 1, 8>}]} {
    %c0 = arith.constant 0 : index
    %c0_0 = arith.constant 0 : index
    %0 = vector.load %arg1[%c0, %c0_0] : memref<8x32xf32, #tpu.memory_space<vmem>>, vector<8x32xf32>
    %c0_1 = arith.constant 0 : index
    %c0_2 = arith.constant 0 : index
    %1 = vector.load %arg2[%c0_1, %c0_2] : memref<64x32xf32, #tpu.memory_space<vmem>>, vector<64x32xf32>
    %cst = arith.constant dense<0.000000e+00> : vector<64x8xf32>
    %2 = tpu.matmul %1, %0, %cst {dimension_numbers = #tpu.dot_dimension_numbers<[1], [1], [0], [0], [0, 0, 1, 0], [], []>} : vector<64x32xf32>, vector<8x32xf32>, vector<64x8xf32> -> vector<64x8xf32>
    %c0_3 = arith.constant 0 : index
    %c0_4 = arith.constant 0 : index
    %3 = vector.load %arg3[%c0_3, %c0_4] : memref<64x1xf32, #tpu.memory_space<vmem>>, vector<64x1xf32>
    %4 = vector.broadcast %3 : vector<64x1xf32> to vector<64x8xf32>
    %5 = arith.addf %2, %4 : vector<64x8xf32>
    %cst_5 = arith.constant 5.000000e-01 : f32
    %6 = vector.broadcast %cst_5 : f32 to vector<64x8xf32>
    %7 = arith.mulf %6, %5 : vector<64x8xf32>
    %8 = math.tanh %7 : vector<64x8xf32>
    %cst_6 = arith.constant 5.000000e-01 : f32
    %9 = vector.broadcast %cst_6 : f32 to vector<64x8xf32>
    %10 = arith.mulf %9, %8 : vector<64x8xf32>
    %cst_7 = arith.constant 5.000000e-01 : f32
    %11 = vector.broadcast %cst_7 : f32 to vector<64x8xf32>
    %12 = arith.addf %10, %11 : vector<64x8xf32>
    %c0_8 = arith.constant 0 : index
    %c0_9 = arith.constant 0 : index
    %13 = vector.load %arg4[%c0_8, %c0_9] : memref<32x64xf32, #tpu.memory_space<vmem>>, vector<32x64xf32>
    %cst_10 = arith.constant dense<0.000000e+00> : vector<32x8xf32>
    %14 = tpu.matmul %13, %12, %cst_10 {dimension_numbers = #tpu.dot_dimension_numbers<[1], [0], [0], [1], [0, 0, 1, 1], [], []>} : vector<32x64xf32>, vector<64x8xf32>, vector<32x8xf32> -> vector<32x8xf32>
    %c0_11 = arith.constant 0 : index
    %c0_12 = arith.constant 0 : index
    %15 = vector.load %arg5[%c0_11, %c0_12] : memref<32x1xf32, #tpu.memory_space<vmem>>, vector<32x1xf32>
    %16 = vector.broadcast %15 : vector<32x1xf32> to vector<32x8xf32>
    %17 = arith.addf %14, %16 : vector<32x8xf32>
    %cst_13 = arith.constant 5.000000e-01 : f32
    %18 = vector.broadcast %cst_13 : f32 to vector<32x8xf32>
    %19 = arith.mulf %18, %17 : vector<32x8xf32>
    %20 = math.tanh %19 : vector<32x8xf32>
    %cst_14 = arith.constant 5.000000e-01 : f32
    %21 = vector.broadcast %cst_14 : f32 to vector<32x8xf32>
    %22 = arith.mulf %21, %20 : vector<32x8xf32>
    %cst_15 = arith.constant 5.000000e-01 : f32
    %23 = vector.broadcast %cst_15 : f32 to vector<32x8xf32>
    %24 = arith.addf %22, %23 : vector<32x8xf32>
    %c0_16 = arith.constant 0 : index
    %c0_17 = arith.constant 0 : index
    %25 = vector.load %arg6[%c0_16, %c0_17] : memref<16x32xf32, #tpu.memory_space<vmem>>, vector<16x32xf32>
    %cst_18 = arith.constant dense<0.000000e+00> : vector<16x8xf32>
    %26 = tpu.matmul %25, %24, %cst_18 {dimension_numbers = #tpu.dot_dimension_numbers<[1], [0], [0], [1], [0, 0, 1, 1], [], []>} : vector<16x32xf32>, vector<32x8xf32>, vector<16x8xf32> -> vector<16x8xf32>
    %c0_19 = arith.constant 0 : index
    %c0_20 = arith.constant 0 : index
    %27 = vector.load %arg7[%c0_19, %c0_20] : memref<16x1xf32, #tpu.memory_space<vmem>>, vector<16x1xf32>
    %28 = vector.broadcast %27 : vector<16x1xf32> to vector<16x8xf32>
    %29 = arith.addf %26, %28 : vector<16x8xf32>
    %cst_21 = arith.constant 5.000000e-01 : f32
    %30 = vector.broadcast %cst_21 : f32 to vector<16x8xf32>
    %31 = arith.mulf %30, %29 : vector<16x8xf32>
    %32 = math.tanh %31 : vector<16x8xf32>
    %cst_22 = arith.constant 5.000000e-01 : f32
    %33 = vector.broadcast %cst_22 : f32 to vector<16x8xf32>
    %34 = arith.mulf %33, %32 : vector<16x8xf32>
    %cst_23 = arith.constant 5.000000e-01 : f32
    %35 = vector.broadcast %cst_23 : f32 to vector<16x8xf32>
    %36 = arith.addf %34, %35 : vector<16x8xf32>
    %c0_24 = arith.constant 0 : index
    %c0_25 = arith.constant 0 : index
    %37 = vector.load %arg8[%c0_24, %c0_25] : memref<16x1xf32, #tpu.memory_space<vmem>>, vector<16x1xf32>
    %38 = vector.broadcast %37 : vector<16x1xf32> to vector<16x8xf32>
    %39 = arith.mulf %36, %38 : vector<16x8xf32>
    %cst_26 = arith.constant dense<0.000000e+00> : vector<8xf32>
    %40 = vector.multi_reduction <add>, %39, %cst_26 [0] : vector<16x8xf32> to vector<8xf32>
    %41 = vector.shape_cast %40 : vector<8xf32> to vector<1x8xf32>
    %c0_27 = arith.constant 0 : index
    %c0_28 = arith.constant 0 : index
    %42 = vector.load %arg9[%c0_27, %c0_28] : memref<1x1xf32, #tpu.memory_space<vmem>>, vector<1x1xf32>
    %43 = vector.broadcast %42 : vector<1x1xf32> to vector<1x8xf32>
    %44 = arith.addf %41, %43 : vector<1x8xf32>
    %cst_29 = arith.constant 5.000000e-01 : f32
    %45 = vector.broadcast %cst_29 : f32 to vector<1x8xf32>
    %46 = arith.mulf %45, %44 : vector<1x8xf32>
    %47 = math.tanh %46 : vector<1x8xf32>
    %cst_30 = arith.constant 5.000000e-01 : f32
    %48 = vector.broadcast %cst_30 : f32 to vector<1x8xf32>
    %49 = arith.mulf %48, %47 : vector<1x8xf32>
    %cst_31 = arith.constant 5.000000e-01 : f32
    %50 = vector.broadcast %cst_31 : f32 to vector<1x8xf32>
    %51 = arith.addf %49, %50 : vector<1x8xf32>
    %c0_32 = arith.constant 0 : index
    %c0_33 = arith.constant 0 : index
    %52 = vector.load %arg10[%c0_32, %c0_33] : memref<1x8xf32, #tpu.memory_space<vmem>>, vector<1x8xf32>
    tpu.vector_store %arg10[%c0_32, %c0_33], %51 {strides = array<i32>} : memref<1x8xf32, #tpu.memory_space<vmem>>, vector<1x8xf32>,
    return
  }
  func.func @transform_0(%arg0: i32) -> (i32, i32) {
    %c0_i32 = arith.constant 0 : i32
    %c0_i32_0 = arith.constant 0 : i32
    return %arg0, %c0_i32 : i32, i32
  }
  func.func @transform_1(%arg0: i32) -> (i32, i32) {
    %c0_i32 = arith.constant 0 : i32
    %c0_i32_0 = arith.constant 0 : i32
    %c0_i32_1 = arith.constant 0 : i32
    return %c0_i32, %c0_i32_0 : i32, i32
  }
  func.func @transform_2(%arg0: i32) -> (i32, i32) {
    %c0_i32 = arith.constant 0 : i32
    %c0_i32_0 = arith.constant 0 : i32
    %c0_i32_1 = arith.constant 0 : i32
    return %c0_i32, %c0_i32_0 : i32, i32
  }
  func.func @transform_3(%arg0: i32) -> (i32, i32) {
    %c0_i32 = arith.constant 0 : i32
    %c0_i32_0 = arith.constant 0 : i32
    %c0_i32_1 = arith.constant 0 : i32
    return %c0_i32, %c0_i32_0 : i32, i32
  }
  func.func @transform_4(%arg0: i32) -> (i32, i32) {
    %c0_i32 = arith.constant 0 : i32
    %c0_i32_0 = arith.constant 0 : i32
    %c0_i32_1 = arith.constant 0 : i32
    return %c0_i32, %c0_i32_0 : i32, i32
  }
  func.func @transform_5(%arg0: i32) -> (i32, i32) {
    %c0_i32 = arith.constant 0 : i32
    %c0_i32_0 = arith.constant 0 : i32
    %c0_i32_1 = arith.constant 0 : i32
    return %c0_i32, %c0_i32_0 : i32, i32
  }
  func.func @transform_6(%arg0: i32) -> (i32, i32) {
    %c0_i32 = arith.constant 0 : i32
    %c0_i32_0 = arith.constant 0 : i32
    %c0_i32_1 = arith.constant 0 : i32
    return %c0_i32, %c0_i32_0 : i32, i32
  }
  func.func @transform_7(%arg0: i32) -> (i32, i32) {
    %c0_i32 = arith.constant 0 : i32
    %c0_i32_0 = arith.constant 0 : i32
    %c0_i32_1 = arith.constant 0 : i32
    return %c0_i32, %c0_i32_0 : i32, i32
  }
  func.func @transform_8(%arg0: i32) -> (i32, i32) {
    %c0_i32 = arith.constant 0 : i32
    %c0_i32_0 = arith.constant 0 : i32
    %c0_i32_1 = arith.constant 0 : i32
    return %c0_i32, %c0_i32_0 : i32, i32
  }
  func.func @transform_9(%arg0: i32) -> (i32, i32) {
    %c0_i32 = arith.constant 0 : i32
    %c0_i32_0 = arith.constant 0 : i32
    return %c0_i32, %arg0 : i32, i32
  }
}

</mosaic_0001>

<llo_original>
// kernel: tpu_custom_call.1
$region0: #{tpu_custom_call.1}
  #allocation0 [shape = 'u32[]', space=smem, size = 0x4, offset = 0x4, fixed_abs, tag = 'smem constant byte address 0x4 - core index']
  #allocation1 [shape = 'u32[72,128]{1,0:T(1,128)}', space=vmem, size = 0x9000, scoped, tag = 'internal scratch']
  #allocation2 [shape = 'f32[1,1]{1,0:T(1,128)S(1)}', space=vmem, size = 0x200, scoped, tag = 'scoped memory for tpu_custom_call.1']
  %s0 = inlined_call_operand.vmem [shape: f32[8,32], index: 0, kind: input, shape index: {}]
  %s1 = inlined_call_operand.vmem [shape: f32[64,32], index: 1, kind: input, shape index: {}]
  %s2 = inlined_call_operand.vmem [shape: f32[64,1], index: 2, kind: input, shape index: {}]
  %s3 = inlined_call_operand.vmem [shape: f32[32,64], index: 3, kind: input, shape index: {}]
  %s4 = inlined_call_operand.vmem [shape: f32[32,1], index: 4, kind: input, shape index: {}]
  %s5 = inlined_call_operand.vmem [shape: f32[16,32], index: 5, kind: input, shape index: {}]
  %s6 = inlined_call_operand.vmem [shape: f32[16,1], index: 6, kind: input, shape index: {}]
  %s7 = inlined_call_operand.vmem [shape: f32[16,1], index: 7, kind: input, shape index: {}]
  %s8 = inlined_call_operand.<no memory space> [shape: f32[1,1], index: 8, kind: input, shape index: {}]
  %s9 = inlined_call_operand.hbm [shape: f32[1,8], index: 9, kind: output, shape index: {}]
  %s10 = sld [smem:[#allocation0]]
  $region46: #{tpu_custom_call.1} parent=0
    _
  %s12 = ssub.s32 1, %s10
  %s13 = scalar_select 0, %s12, %s10
  %v14 = vstv %s8
  %15 = vst [vmem:[#allocation2] sm:$0x1] %v14
  $region1: #{tpu_custom_call.1} parent=0
    #allocation3 [shape = 'u8[512]{0}', space=vmem, size = 0x400, scoped, tag = 'output window, operand 0, single buffered']
    #allocation4 [shape = 's32[1]{0}', space=sflag, size = 0x4, scoped, tag = 'scoped memory for tpu_custom_call.1']
    %16 = vsyncpa [#allocation4], 0
    // Predicated region
    $region2: #{tpu_custom_call.1} parent=1 // pred_check
      _
    $region3: #{tpu_custom_call.1} parent=1 // pred_check_branch
      %18 = sbr.rel (0) target = $region5
    $region4: #{tpu_custom_call.1} parent=1 // pred_region
      _
    $region5: #{tpu_custom_call.1} parent=1 // pred_fallthru
      _
    // Predicated region
    $region6: #{tpu_custom_call.1} parent=1 // pred_check
      _
    $region7: #{tpu_custom_call.1} parent=1 // pred_check_branch
      %20 = sbr.rel (0) target = $region9
    $region8: #{tpu_custom_call.1} parent=1 // pred_region
      _
    $region9: #{tpu_custom_call.1} parent=1 // pred_fallthru
      _
    // Predicated region
    $region10: #{tpu_custom_call.1} parent=1 // pred_check
      _
    $region11: #{tpu_custom_call.1} parent=1 // pred_check_branch
      %22 = sbr.rel (0) target = $region13
    $region12: #{tpu_custom_call.1} parent=1 // pred_region
      _
    $region13: #{tpu_custom_call.1} parent=1 // pred_fallthru
      _
    // Predicated region
    $region14: #{tpu_custom_call.1} parent=1 // pred_check
      _
    $region15: #{tpu_custom_call.1} parent=1 // pred_check_branch
      %24 = sbr.rel (0) target = $region17
    $region16: #{tpu_custom_call.1} parent=1 // pred_region
      _
    $region17: #{tpu_custom_call.1} parent=1 // pred_fallthru
      _
    // Predicated region
    $region18: #{tpu_custom_call.1} parent=1 // pred_check
      _
    $region19: #{tpu_custom_call.1} parent=1 // pred_check_branch
      %26 = sbr.rel (0) target = $region21
    $region20: #{tpu_custom_call.1} parent=1 // pred_region
      _
    $region21: #{tpu_custom_call.1} parent=1 // pred_fallthru
      _
    // Predicated region
    $region22: #{tpu_custom_call.1} parent=1 // pred_check
      _
    $region23: #{tpu_custom_call.1} parent=1 // pred_check_branch
      %28 = sbr.rel (0) target = $region25
    $region24: #{tpu_custom_call.1} parent=1 // pred_region
      _
    $region25: #{tpu_custom_call.1} parent=1 // pred_fallthru
      _
    // Predicated region
    $region26: #{tpu_custom_call.1} parent=1 // pred_check
      _
    $region27: #{tpu_custom_call.1} parent=1 // pred_check_branch
      %30 = sbr.rel (0) target = $region29
    $region28: #{tpu_custom_call.1} parent=1 // pred_region
      _
    $region29: #{tpu_custom_call.1} parent=1 // pred_fallthru
      _
    // Predicated region
    $region30: #{tpu_custom_call.1} parent=1 // pred_check
      _
    $region31: #{tpu_custom_call.1} parent=1 // pred_check_branch
      %32 = sbr.rel (0) target = $region33
    $region32: #{tpu_custom_call.1} parent=1 // pred_region
      _
    $region33: #{tpu_custom_call.1} parent=1 // pred_fallthru
      _
    // Predicated region
    $region34: #{tpu_custom_call.1} parent=1 // pred_check
      _
    $region35: #{tpu_custom_call.1} parent=1 // pred_check_branch
      %34 = sbr.rel (0) target = $region37
    $region36: #{tpu_custom_call.1} parent=1 // pred_region
      _
    $region37: #{tpu_custom_call.1} parent=1 // pred_fallthru
      _
    %v35 = vld [vmem:[%s0] sm:$0xff]
    %v36 = vld [vmem:[%s1] sm:$0xff]
    %v37 = vld [vmem:[%s1 + $0x8] sm:$0xff]
    %v38 = vld [vmem:[%s1 + $0x10] sm:$0xff]
    %v39 = vld [vmem:[%s1 + $0x18] sm:$0xff]
    %v40 = vld [vmem:[%s1 + $0x20] sm:$0xff]
    %v41 = vld [vmem:[%s1 + $0x28] sm:$0xff]
    %v42 = vld [vmem:[%s1 + $0x30] sm:$0xff]
    %v43 = vld [vmem:[%s1 + $0x38] sm:$0xff]
    %v44 = vld [vmem:[%s2] sm:$0xff]
    %v45 = vld [vmem:[%s2 + $0x8] sm:$0xff]
    %v46 = vld [vmem:[%s2 + $0x10] sm:$0xff]
    %v47 = vld [vmem:[%s2 + $0x18] sm:$0xff]
    %v48 = vld [vmem:[%s2 + $0x20] sm:$0xff]
    %v49 = vld [vmem:[%s2 + $0x28] sm:$0xff]
    %v50 = vld [vmem:[%s2 + $0x30] sm:$0xff]
    %v51 = vld [vmem:[%s2 + $0x38] sm:$0xff]
    %53 = vset.pattern.permute.xlu0 0
    %54 = vperm.xlu0 %53, %v44
    %v55 = vpop.permute.xlu0 %54
    %58 = vset.pattern.permute.xlu0 0
    %59 = vperm.xlu0 %58, %v45
    %v60 = vpop.permute.xlu0 %59
    %63 = vset.pattern.permute.xlu0 0
    %64 = vperm.xlu0 %63, %v46
    %v65 = vpop.permute.xlu0 %64
    %68 = vset.pattern.permute.xlu0 0
    %69 = vperm.xlu0 %68, %v47
    %v70 = vpop.permute.xlu0 %69
    %73 = vset.pattern.permute.xlu0 0
    %74 = vperm.xlu0 %73, %v48
    %v75 = vpop.permute.xlu0 %74
    %78 = vset.pattern.permute.xlu0 0
    %79 = vperm.xlu0 %78, %v49
    %v80 = vpop.permute.xlu0 %79
    %83 = vset.pattern.permute.xlu0 0
    %84 = vperm.xlu0 %83, %v50
    %v85 = vpop.permute.xlu0 %84
    %88 = vset.pattern.permute.xlu0 0
    %89 = vperm.xlu0 %88, %v51
    %v90 = vpop.permute.xlu0 %89
    %vm92 = vcmask 261120
    %v94 = vsel %vm92, %v36, 0
    %v97 = vsel %vm92, %v37, 0
    %v100 = vsel %vm92, %v38, 0
    %v103 = vsel %vm92, %v39, 0
    %v106 = vsel %vm92, %v40, 0
    %v109 = vsel %vm92, %v41, 0
    %v112 = vsel %vm92, %v42, 0
    %v115 = vsel %vm92, %v43, 0
    %v118 = vsel %vm92, %v35, 0
    %120 = vmatpush.xpose.msra.mxu0 0.0
    %121 = vmatpush.xpose.msra.mxu0 0.0
    %122 = vmatpush.xpose.msra.mxu0 0.0
    %123 = vmatpush.xpose.msra.mxu0 0.0
    %124 = vmatpush.xpose.msra.mxu0 0.0
    %125 = vmatpush.xpose.msra.mxu0 0.0
    %126 = vmatpush.xpose.msra.mxu0 0.0
    %127 = vmatpush.xpose.msra.mxu0 0.0
    %128 = vmatpush.xpose.msra.mxu0 0.0
    %129 = vmatpush.xpose.msra.mxu0 0.0
    %130 = vmatpush.xpose.msra.mxu0 0.0
    %131 = vmatpush.xpose.msra.mxu0 0.0
    %132 = vmatpush.xpose.msra.mxu0 0.0
    %133 = vmatpush.xpose.msra.mxu0 0.0
    %134 = vmatpush.xpose.msra.mxu0 0.0
    %135 = vmatpush.xpose.msra.mxu0 %v118
    %136 = vmatmul.f32.gmra.mxu0 %v94
    %v137 = vpop.f32.mrf.mxu0
    %v138 = vadd.f32 %v55, %v137
    %139 = vmatmul.f32.gmra.mxu0 %v97
    %v140 = vpop.f32.mrf.mxu0
    %v141 = vadd.f32 %v60, %v140
    %142 = vmatmul.f32.gmra.mxu0 %v100
    %v143 = vpop.f32.mrf.mxu0
    %v144 = vadd.f32 %v65, %v143
    %145 = vmatmul.f32.gmra.mxu0 %v103
    %v146 = vpop.f32.mrf.mxu0
    %v147 = vadd.f32 %v70, %v146
    %148 = vmatmul.f32.gmra.mxu0 %v106
    %v149 = vpop.f32.mrf.mxu0
    %v150 = vadd.f32 %v75, %v149
    %151 = vmatmul.f32.gmra.mxu0 %v109
    %v152 = vpop.f32.mrf.mxu0
    %v153 = vadd.f32 %v80, %v152
    %154 = vmatmul.f32.gmra.mxu0 %v112
    %v155 = vpop.f32.mrf.mxu0
    %v156 = vadd.f32 %v85, %v155
    %157 = vmatmul.f32.gmra.mxu0 %v115
    %v158 = vpop.f32.mrf.mxu0
    %v159 = vadd.f32 %v90, %v158
    %160 = vdwg.mxu0
    %v161 = vmul.f32 %v138, 0.5
    %v162 = vmul.f32 %v141, 0.5
    %v163 = vmul.f32 %v144, 0.5
    %v164 = vmul.f32 %v147, 0.5
    %v165 = vmul.f32 %v150, 0.5
    %v166 = vmul.f32 %v153, 0.5
    %v167 = vmul.f32 %v156, 0.5
    %v168 = vmul.f32 %v159, 0.5
    %v169 = vtanh.pop %v161
    %v170 = vtanh.pop %v162
    %v171 = vtanh.pop %v163
    %v172 = vtanh.pop %v164
    %v173 = vtanh.pop %v165
    %v174 = vtanh.pop %v166
    %v175 = vtanh.pop %v167
    %v176 = vtanh.pop %v168
    %v177 = vmul.f32 %v169, 0.5
    %v178 = vmul.f32 %v170, 0.5
    %v179 = vmul.f32 %v171, 0.5
    %v180 = vmul.f32 %v172, 0.5
    %v181 = vmul.f32 %v173, 0.5
    %v182 = vmul.f32 %v174, 0.5
    %v183 = vmul.f32 %v175, 0.5
    %v184 = vmul.f32 %v176, 0.5
    %v185 = vadd.f32 %v177, 0.5
    %v186 = vadd.f32 %v178, 0.5
    %v187 = vadd.f32 %v179, 0.5
    %v188 = vadd.f32 %v180, 0.5
    %v189 = vadd.f32 %v181, 0.5
    %v190 = vadd.f32 %v182, 0.5
    %v191 = vadd.f32 %v183, 0.5
    %v192 = vadd.f32 %v184, 0.5
    %v193 = vld [vmem:[%s3] sm:$0xff]
    %v194 = vld [vmem:[%s3 + $0x8] sm:$0xff]
    %v195 = vld [vmem:[%s3 + $0x10] sm:$0xff]
    %v196 = vld [vmem:[%s3 + $0x18] sm:$0xff]
    %v197 = vld [vmem:[%s4] sm:$0xff]
    %v198 = vld [vmem:[%s4 + $0x8] sm:$0xff]
    %v199 = vld [vmem:[%s4 + $0x10] sm:$0xff]
    %v200 = vld [vmem:[%s4 + $0x18] sm:$0xff]
    %202 = vset.pattern.permute.xlu0 0
    %203 = vperm.xlu0 %202, %v197
    %v204 = vpop.permute.xlu0 %203
    %207 = vset.pattern.permute.xlu0 0
    %208 = vperm.xlu0 %207, %v198
    %v209 = vpop.permute.xlu0 %208
    %212 = vset.pattern.permute.xlu0 0
    %213 = vperm.xlu0 %212, %v199
    %v214 = vpop.permute.xlu0 %213
    %217 = vset.pattern.permute.xlu0 0
    %218 = vperm.xlu0 %217, %v200
    %v219 = vpop.permute.xlu0 %218
    %vm221 = vcmask 523264
    %v223 = vsel %vm221, %v193, 0
    %v226 = vsel %vm221, %v194, 0
    %v229 = vsel %vm221, %v195, 0
    %v232 = vsel %vm221, %v196, 0
    %234 = vmatpush.msra.mxu0 0.0
    %235 = vmatpush.msra.mxu0 0.0
    %236 = vmatpush.msra.mxu0 0.0
    %237 = vmatpush.msra.mxu0 0.0
    %238 = vmatpush.msra.mxu0 0.0
    %239 = vmatpush.msra.mxu0 0.0
    %240 = vmatpush.msra.mxu0 0.0
    %241 = vmatpush.msra.mxu0 0.0
    %242 = vmatpush.msra.mxu0 %v192
    %243 = vmatpush.msra.mxu0 %v191
    %244 = vmatpush.msra.mxu0 %v190
    %245 = vmatpush.msra.mxu0 %v189
    %246 = vmatpush.msra.mxu0 %v188
    %247 = vmatpush.msra.mxu0 %v187
    %248 = vmatpush.msra.mxu0 %v186
    %249 = vmatpush.msra.mxu0 %v185
    %250 = vmatmul.f32.gmra.mxu0 %v223
    %v251 = vpop.f32.mrf.mxu0
    %v252 = vadd.f32 %v204, %v251
    %253 = vmatmul.f32.gmra.mxu0 %v226
    %v254 = vpop.f32.mrf.mxu0
    %v255 = vadd.f32 %v209, %v254
    %256 = vmatmul.f32.gmra.mxu0 %v229
    %v257 = vpop.f32.mrf.mxu0
    %v258 = vadd.f32 %v214, %v257
    %259 = vmatmul.f32.gmra.mxu0 %v232
    %v260 = vpop.f32.mrf.mxu0
    %v261 = vadd.f32 %v219, %v260
    %262 = vdwg.mxu0
    %v263 = vmul.f32 %v252, 0.5
    %v264 = vmul.f32 %v255, 0.5
    %v265 = vmul.f32 %v258, 0.5
    %v266 = vmul.f32 %v261, 0.5
    %v267 = vtanh.pop %v263
    %v268 = vtanh.pop %v264
    %v269 = vtanh.pop %v265
    %v270 = vtanh.pop %v266
    %v271 = vmul.f32 %v267, 0.5
    %v272 = vmul.f32 %v268, 0.5
    %v273 = vmul.f32 %v269, 0.5
    %v274 = vmul.f32 %v270, 0.5
    %v275 = vadd.f32 %v271, 0.5
    %v276 = vadd.f32 %v272, 0.5
    %v277 = vadd.f32 %v273, 0.5
    %v278 = vadd.f32 %v274, 0.5
    %v279 = vld [vmem:[%s5] sm:$0xff]
    %v280 = vld [vmem:[%s5 + $0x8] sm:$0xff]
    %v281 = vld [vmem:[%s6] sm:$0xff]
    %v282 = vld [vmem:[%s6 + $0x8] sm:$0xff]
    %284 = vset.pattern.permute.xlu0 0
    %285 = vperm.xlu0 %284, %v281
    %v286 = vpop.permute.xlu0 %285
    %289 = vset.pattern.permute.xlu0 0
    %290 = vperm.xlu0 %289, %v282
    %v291 = vpop.permute.xlu0 %290
    %v294 = vsel %vm92, %v279, 0
    %v297 = vsel %vm92, %v280, 0
    %299 = vmatpush.msra.mxu0 0.0
    %300 = vmatpush.msra.mxu0 0.0
    %301 = vmatpush.msra.mxu0 0.0
    %302 = vmatpush.msra.mxu0 0.0
    %303 = vmatpush.msra.mxu0 0.0
    %304 = vmatpush.msra.mxu0 0.0
    %305 = vmatpush.msra.mxu0 0.0
    %306 = vmatpush.msra.mxu0 0.0
    %307 = vmatpush.msra.mxu0 0.0
    %308 = vmatpush.msra.mxu0 0.0
    %309 = vmatpush.msra.mxu0 0.0
    %310 = vmatpush.msra.mxu0 0.0
    %311 = vmatpush.msra.mxu0 %v278
    %312 = vmatpush.msra.mxu0 %v277
    %313 = vmatpush.msra.mxu0 %v276
    %314 = vmatpush.msra.mxu0 %v275
    %315 = vmatmul.f32.gmra.mxu0 %v294
    %v316 = vpop.f32.mrf.mxu0
    %v317 = vadd.f32 %v286, %v316
    %318 = vmatmul.f32.gmra.mxu0 %v297
    %v319 = vpop.f32.mrf.mxu0
    %v320 = vadd.f32 %v291, %v319
    %321 = vdwg.mxu0
    %v322 = vmul.f32 %v317, 0.5
    %v323 = vmul.f32 %v320, 0.5
    %v324 = vtanh.pop %v322
    %v325 = vtanh.pop %v323
    %v326 = vmul.f32 %v324, 0.5
    %v327 = vmul.f32 %v325, 0.5
    %v328 = vadd.f32 %v326, 0.5
    %v329 = vadd.f32 %v327, 0.5
    %v330 = vld [vmem:[%s7] sm:$0xff]
    %v331 = vld [vmem:[%s7 + $0x8] sm:$0xff]
    %333 = vset.pattern.permute.xlu0 0
    %334 = vperm.xlu0 %333, %v330
    %v335 = vpop.permute.xlu0 %334
    %338 = vset.pattern.permute.xlu0 0
    %339 = vperm.xlu0 %338, %v331
    %v340 = vpop.permute.xlu0 %339
    %v342 = vmul.f32 %v328, %v335
    %v343 = vmul.f32 %v329, %v340
    %vm344 = vcmask 64512
    %v345 = vsel %vm344, %v342, 0.0
    %v346 = vsel %vm344, %v343, 0.0
    %v347 = vadd.f32 %v345, %v346
    %v348 = vrot.slane %v347, 4
    %v349 = vadd.f32 %v347, %v348
    %v350 = vrot.slane %v349, 2
    %v351 = vadd.f32 %v349, %v350
    %v352 = vrot.slane %v351, 1
    %v353 = vadd.f32 %v351, %v352
    %v354 = vld [vmem:[#allocation2] sm:$0x1]
    %356 = vset.pattern.permute.xlu0 0
    %357 = vperm.xlu0 %356, %v354
    %v358 = vpop.permute.xlu0 %357
    %v360 = vperm.slane %v358, 0
    %v361 = vadd.f32 %v353, %v360
    %v362 = vmul.f32 %v361, 0.5
    %v363 = vtanh.pop %v362
    %v364 = vmul.f32 %v363, 0.5
    %v365 = vadd.f32 %v364, 0.5
    %vm366 = vcmask 57344
    %367 = vst.msk [vmem:[#allocation3] sm:$0x1] %vm366, %v365
    // Predicated region
    $region38: #{tpu_custom_call.1} parent=1 // pred_check
      _
    $region39: #{tpu_custom_call.1} parent=1 // pred_check_branch
      %369 = sbr.rel (0) target = $region41
    $region40: #{tpu_custom_call.1} parent=1 // pred_region
      %371 = vsyncadd [#allocation4], 0
      %s373 = sshll.u32 [#allocation3], 4
      %s374 = int_to_ptr.vmem [resolvable:$true] %s373
      %s375 = sshll.u32 %s9, 4
      %s376 = int_to_ptr.hbm [resolvable:$true] %s375
      %378 = dma.vmem_to_hbm [thread:$0]  %s374, 16, %s376, [#allocation4]
    $region41: #{tpu_custom_call.1} parent=1 // pred_fallthru
      _
    // Predicated region
    $region42: #{tpu_custom_call.1} parent=1 // pred_check
      _
    $region43: #{tpu_custom_call.1} parent=1 // pred_check_branch
      %380 = sbr.rel (0) target = $region45
    $region44: #{tpu_custom_call.1} parent=1 // pred_region
      %382 = dma.done [#allocation4], 16
    $region45: #{tpu_custom_call.1} parent=1 // pred_fallthru
      _
    %383 = vsyncpa [#allocation4], 1

</llo_original>
